<compile_context>
chip_gen: v7x
topology: tpu7x:2x2x1
jax: 0.10.0
libtpu: 0.0.40
codegen_flags: <defaults>
</compile_context>

<pallas_src>
import functools
import math

import jax
import jax.numpy as jnp
from jax.experimental import pallas as pl
from jax.experimental.pallas import tpu as pltpu


def _kl_row_kernel(pred_ref, target_ref, row_ref, *, eps, d_total, td, nk):
    """One (TB, TD) tile: pointwise KL on VPU/EUP, lane-reduce to (TB, 1) row sums,
    accumulated into the resident output block across the D (k) grid axis."""
    k = pl.program_id(1)

    p = jnp.clip(pred_ref[...].astype(jnp.float32), eps, 1.0 - eps)
    t = jnp.clip(target_ref[...].astype(jnp.float32), eps, 1.0 - eps)
    kl = t * (jnp.log(t) - jnp.log(p))

    # Mask padded columns of the last (ragged) D tile so they don't pollute row sums.
    if d_total % td != 0:
        col = k * td + jax.lax.broadcasted_iota(jnp.int32, kl.shape, 1)
        kl = jnp.where(col < d_total, kl, 0.0)

    partial = jnp.sum(kl, axis=-1, keepdims=True)  # (TB, 1) per-row partial sums

    if nk == 1:
        # Single reduction step: straight store, no accumulator branching.
        row_ref[...] = partial
    else:
        @pl.when(k == 0)
        def _():
            row_ref[...] = partial

        @pl.when(k > 0)
        def _():
            row_ref[...] = row_ref[...] + partial


def _pick_tiles(B, D, itemsize):
    """Pick (row_block, col_block) so each input block is <= ~2 MiB.
    2 inputs x 2 pipeline buffers ~= 8 MiB -> fits every TPU generation's
    scoped VMEM (v5e 16 MiB default, v6e 32 MiB, v7x 32 MiB of 64 MiB physical)."""
    budget = 2 * 1024 * 1024

    # Columns per tile: whole distribution if 8 rows of it fit, else a lane-aligned chunk.
    if D * 8 * itemsize <= budget:
        td = D
    else:
        td = max(128, min(D, (budget // (8 * itemsize)) // 128 * 128))

    # Rows per tile: fill the budget, multiple of 8, modest cap to bound block size.
    tb = budget // max(1, td * itemsize)
    tb = max(8, min(4096, (tb // 8) * 8))
    if tb >= B:
        tb = B  # full batch dim in one tile (always legal: equals the array dim)
    return tb, td


def non_log_kl_div_loss(pred, target, keep_batch_dim=False, eps=1e-15,
                        row_block=None, col_block=None):
    """Pallas TPU forward of NonLogKLDivLoss. Accepts rank >= 2 inputs; KL is taken
    over the last dim. 'batchmean' divides by pred.shape[0] (PyTorch semantics)."""
    assert pred.shape == target.shape and pred.ndim >= 2
    orig_shape = pred.shape
    batch_size = orig_shape[0]
    D = orig_shape[-1]
    B = math.prod(orig_shape[:-1])

    # Do NOT upcast here: bf16 inputs stay bf16 through HBM (kernel upcasts to f32).
    pred2 = pred.reshape(B, D)
    target2 = target.reshape(B, D)

    itemsize = pred2.dtype.itemsize
    tb_auto, td_auto = _pick_tiles(B, D, itemsize)
    tb = row_block if row_block is not None else tb_auto
    td = col_block if col_block is not None else td_auto
    tb = min(tb, B)
    td = min(td, D)

    nb = pl.cdiv(B, tb)
    nk = pl.cdiv(D, td)

    cost = pl.CostEstimate(
        flops=5 * B * D,                 # clip x2, sub, mul, add per element (approx)
        transcendentals=2 * B * D,       # two logs per element
        bytes_accessed=2 * B * D * itemsize + 4 * B,
    )

    rows = pl.pallas_call(
        functools.partial(_kl_row_kernel, eps=float(eps), d_total=D, td=td, nk=nk),
        out_shape=jax.ShapeDtypeStruct((B, 1), jnp.float32),
        grid=(nb, nk),
        in_specs=[
            pl.BlockSpec((tb, td), lambda i, k: (i, k)),
            pl.BlockSpec((tb, td), lambda i, k: (i, k)),
        ],
        out_specs=pl.BlockSpec((tb, 1), lambda i, k: (i, 0)),
        compiler_params=pltpu.CompilerParams(
            dimension_semantics=("parallel", "arbitrary"),
            vmem_limit_bytes=32 * 1024 * 1024,
        ),
        cost_estimate=cost,
    )(pred2, target2)

    rows = rows[:, 0]
    if keep_batch_dim:
        return rows.reshape(orig_shape[:-1])
    # 'batchmean': sum over everything divided by the leading batch dim (PyTorch).
    return jnp.sum(rows) / jnp.float32(batch_size)


def _reference(pred, target, keep_batch_dim=False, eps=1e-15):
    p = jnp.clip(pred.astype(jnp.float32), eps, 1.0 - eps)
    t = jnp.clip(target.astype(jnp.float32), eps, 1.0 - eps)
    kl = t * (jnp.log(t) - jnp.log(p))
    if keep_batch_dim:
        return jnp.sum(kl, axis=-1)
    return jnp.sum(kl) / pred.shape[0]


if __name__ == "__main__":
    key = jax.random.PRNGKey(0)
    k1, k2, k3, k4 = jax.random.split(key, 4)

    # Case 1: small module-like shapes (8 rows of 32-way distributions), single tile.
    B, D = 8, 32
    pred = jax.nn.softmax(jax.random.normal(k1, (B, D), dtype=jnp.float32), axis=-1)
    target = jax.nn.softmax(jax.random.normal(k2, (B, D), dtype=jnp.float32), axis=-1)

    out_mean = jax.block_until_ready(non_log_kl_div_loss(pred, target, keep_batch_dim=False))
    out_rows = jax.block_until_ready(non_log_kl_div_loss(pred, target, keep_batch_dim=True))
    ref_mean = _reference(pred, target, keep_batch_dim=False)
    ref_rows = _reference(pred, target, keep_batch_dim=True)
    assert out_rows.shape == (B,)
    assert jnp.allclose(out_mean, ref_mean, rtol=1e-5, atol=1e-6)
    assert jnp.allclose(out_rows, ref_rows, rtol=1e-5, atol=1e-6)

    # Case 2: exercises the grid — multiple (partial) batch tiles and a tiled,
    # masked reduction axis (D=200 is not a multiple of the 128-column block).
    B2, D2 = 20, 200
    pred2 = jax.nn.softmax(jax.random.normal(k3, (B2, D2), dtype=jnp.float32), axis=-1)
    target2 = jax.nn.softmax(jax.random.normal(k4, (B2, D2), dtype=jnp.float32), axis=-1)

    out2_mean = jax.block_until_ready(
        non_log_kl_div_loss(pred2, target2, keep_batch_dim=False, row_block=8, col_block=128))
    out2_rows = jax.block_until_ready(
        non_log_kl_div_loss(pred2, target2, keep_batch_dim=True, row_block=8, col_block=128))
    ref2_mean = _reference(pred2, target2, keep_batch_dim=False)
    ref2_rows = _reference(pred2, target2, keep_batch_dim=True)
    assert out2_rows.shape == (B2,)
    assert jnp.allclose(out2_mean, ref2_mean, rtol=1e-5, atol=1e-6)
    assert jnp.allclose(out2_rows, ref2_rows, rtol=1e-5, atol=1e-6)

    print("KERNEL_OK")
</pallas_src>

<mosaic_0001>
module attributes {stable_mosaic.version = 11 : i64} {
  func.func @_kl_row_kernel(%arg0: i32, %arg1: i32, %arg2: memref<8x32xf32, #tpu.memory_space<vmem>>, %arg3: memref<8x32xf32, #tpu.memory_space<vmem>>, %arg4: memref<8x1xf32, #tpu.memory_space<vmem>>) attributes {dimension_semantics = [#tpu.dimension_semantics<parallel>, #tpu.dimension_semantics<arbitrary>], iteration_bounds = array<i64: 1, 1>, scalar_prefetch = 0 : i64, scratch_operands = 0 : i64, tpu.core_type = #tpu.core_type<tc>, window_params = [{transform_indices = @transform_0, window_bounds = array<i64: 8, 32>}, {transform_indices = @transform_1, window_bounds = array<i64: 8, 32>}, {transform_indices = @transform_2, window_bounds = array<i64: 8, 1>}]} {
    %c0 = arith.constant 0 : index
    %c0_0 = arith.constant 0 : index
    %0 = vector.load %arg2[%c0, %c0_0] : memref<8x32xf32, #tpu.memory_space<vmem>>, vector<8x32xf32>
    %cst = arith.constant 1.000000e-15 : f32
    %cst_1 = arith.constant 1.000000e+00 : f32
    %1 = vector.broadcast %cst : f32 to vector<8x32xf32>
    %2 = arith.maximumf %1, %0 : vector<8x32xf32>
    %3 = vector.broadcast %cst_1 : f32 to vector<8x32xf32>
    %4 = arith.minimumf %3, %2 : vector<8x32xf32>
    %c0_2 = arith.constant 0 : index
    %c0_3 = arith.constant 0 : index
    %5 = vector.load %arg3[%c0_2, %c0_3] : memref<8x32xf32, #tpu.memory_space<vmem>>, vector<8x32xf32>
    %cst_4 = arith.constant 1.000000e-15 : f32
    %cst_5 = arith.constant 1.000000e+00 : f32
    %6 = vector.broadcast %cst_4 : f32 to vector<8x32xf32>
    %7 = arith.maximumf %6, %5 : vector<8x32xf32>
    %8 = vector.broadcast %cst_5 : f32 to vector<8x32xf32>
    %9 = arith.minimumf %8, %7 : vector<8x32xf32>
    %10 = math.log %9 : vector<8x32xf32>
    %11 = math.log %4 : vector<8x32xf32>
    %12 = arith.subf %10, %11 : vector<8x32xf32>
    %13 = arith.mulf %9, %12 : vector<8x32xf32>
    %cst_6 = arith.constant dense<0.000000e+00> : vector<8xf32>
    %14 = vector.multi_reduction <add>, %13, %cst_6 [1] : vector<8x32xf32> to vector<8xf32>
    %15 = vector.shape_cast %14 : vector<8xf32> to vector<8x1xf32>
    %c0_7 = arith.constant 0 : index
    %c0_8 = arith.constant 0 : index
    %16 = vector.load %arg4[%c0_7, %c0_8] : memref<8x1xf32, #tpu.memory_space<vmem>>, vector<8x1xf32>
    tpu.vector_store %arg4[%c0_7, %c0_8], %15 {strides = array<i32>} : memref<8x1xf32, #tpu.memory_space<vmem>>, vector<8x1xf32>,
    return
  }
  func.func @transform_0(%arg0: i32, %arg1: i32) -> (i32, i32) {
    %c0_i32 = arith.constant 0 : i32
    return %arg0, %arg1 : i32, i32
  }
  func.func @transform_1(%arg0: i32, %arg1: i32) -> (i32, i32) {
    %c0_i32 = arith.constant 0 : i32
    return %arg0, %arg1 : i32, i32
  }
  func.func @transform_2(%arg0: i32, %arg1: i32) -> (i32, i32) {
    %c0_i32 = arith.constant 0 : i32
    %c0_i32_0 = arith.constant 0 : i32
    return %arg0, %c0_i32 : i32, i32
  }
}

</mosaic_0001>

<llo_original>
// kernel: tpu_custom_call.1
$region0: #{tpu_custom_call.1}
  #allocation0 [shape = 'u32[]', space=smem, size = 0x4, offset = 0x4, fixed_abs, tag = 'smem constant byte address 0x4 - core index']
  #allocation1 [shape = 'u32[144,128]{1,0:T(1,128)}', space=vmem, size = 0x12000, scoped, tag = 'internal scratch']
  %s0 = inlined_call_operand.hbm [shape: f32[8,32], index: 0, kind: input, shape index: {}]
  %s1 = inlined_call_operand.hbm [shape: f32[8,32], index: 1, kind: input, shape index: {}]
  %s2 = inlined_call_operand.vmem [shape: f32[8,1], index: 2, kind: output, shape index: {}]
  %s3 = sld [smem:[#allocation0]]
  $region26: #{tpu_custom_call.1} parent=0
    _
  %s5 = ssub.s32 1, %s3
  %s6 = scalar_select 0, %s5, %s3
  $region1: #{tpu_custom_call.1} parent=0
    #allocation2 [shape = 'u8[4096]{0}', space=vmem, size = 0x1000, scoped, tag = 'input window, operand 0, single buffered']
    #allocation3 [shape = 's32[1]{0}', space=sflag, size = 0x4, scoped, tag = 'scoped memory for tpu_custom_call.1']
    #allocation4 [shape = 'u8[4096]{0}', space=vmem, size = 0x1000, scoped, tag = 'input window, operand 1, single buffered']
    #allocation5 [shape = 's32[1]{0}', space=sflag, size = 0x4, scoped, tag = 'scoped memory for tpu_custom_call.1']
    %7 = vsyncpa [#allocation3], 0
    %8 = vsyncpa [#allocation5], 0
    // Predicated region
    $region2: #{tpu_custom_call.1} parent=1 // pred_check
      _
    $region3: #{tpu_custom_call.1} parent=1 // pred_check_branch
      %10 = sbr.rel (0) target = $region5
    $region4: #{tpu_custom_call.1} parent=1 // pred_region
      %s12 = ssub.s32 128, 128
      %13 = vsyncadd [#allocation3], %s12
      %s15 = sshll.u32 [#allocation2], 4
      %s16 = int_to_ptr.vmem [resolvable:$true] %s15
      %18 = dma.hbm_to_vmem [thread:$0]  %s0, 128, %s16, [#allocation3]
    $region5: #{tpu_custom_call.1} parent=1 // pred_fallthru
      _
    // Predicated region
    $region6: #{tpu_custom_call.1} parent=1 // pred_check
      _
    $region7: #{tpu_custom_call.1} parent=1 // pred_check_branch
      %20 = sbr.rel (0) target = $region9
    $region8: #{tpu_custom_call.1} parent=1 // pred_region
      %s22 = ssub.s32 128, 128
      %23 = vsyncadd [#allocation5], %s22
      %s25 = sshll.u32 [#allocation4], 4
      %s26 = int_to_ptr.vmem [resolvable:$true] %s25
      %28 = dma.hbm_to_vmem [thread:$0]  %s1, 128, %s26, [#allocation5]
    $region9: #{tpu_custom_call.1} parent=1 // pred_fallthru
      _
    // Predicated region
    $region10: #{tpu_custom_call.1} parent=1 // pred_check
      _
    $region11: #{tpu_custom_call.1} parent=1 // pred_check_branch
      %30 = sbr.rel (0) target = $region13
    $region12: #{tpu_custom_call.1} parent=1 // pred_region
      %31 = dma.done [#allocation3], 128
    $region13: #{tpu_custom_call.1} parent=1 // pred_fallthru
      _
    // Predicated region
    $region14: #{tpu_custom_call.1} parent=1 // pred_check
      _
    $region15: #{tpu_custom_call.1} parent=1 // pred_check_branch
      %33 = sbr.rel (0) target = $region17
    $region16: #{tpu_custom_call.1} parent=1 // pred_region
      %34 = dma.done [#allocation5], 128
    $region17: #{tpu_custom_call.1} parent=1 // pred_fallthru
      _
    %v35 = vld [vmem:[#allocation2] sm:$0xff]
    %v36 = vmax.f32 %v35, 1e-15
    %v37 = vmin.f32 %v36, 1.0
    %v38 = vld [vmem:[#allocation4] sm:$0xff]
    %v39 = vmax.f32 %v38, 1e-15
    %v40 = vmin.f32 %v39, 1.0
    %v41 = vlog2.pop %v40
    %v42 = vmul.f32 %v41, 0.6931472
    %v43 = vlog2.pop %v37
    %v44 = vmul.f32 %v43, 0.6931472
    %v45 = vsub.f32 %v42, %v44
    %v46 = vmul.f32 %v40, %v45
    %vm47 = vcmask 261120
    %v48 = vsel %vm47, %v46, 0.0
    %49 = vadd.xlane.f32.xlu0 %v48
    %v50 = vpop.xlane.xlu0 %49
    %vm51 = vcmask 7168
    %52 = vst.msk [vmem:[%s2] sm:$0xff] %vm51, %v50
    // Predicated region
    $region18: #{tpu_custom_call.1} parent=1 // pred_check
      _
    $region19: #{tpu_custom_call.1} parent=1 // pred_check_branch
      %54 = sbr.rel (0) target = $region21
    $region20: #{tpu_custom_call.1} parent=1 // pred_region
      _
    $region21: #{tpu_custom_call.1} parent=1 // pred_fallthru
      _
    // Predicated region
    $region22: #{tpu_custom_call.1} parent=1 // pred_check
      _
    $region23: #{tpu_custom_call.1} parent=1 // pred_check_branch
      %56 = sbr.rel (0) target = $region25
    $region24: #{tpu_custom_call.1} parent=1 // pred_region
      _
    $region25: #{tpu_custom_call.1} parent=1 // pred_fallthru
      _
    %57 = vsyncpa [#allocation3], 1
    %58 = vsyncpa [#allocation5], 1

</llo_original>
